<compile_context>
chip_gen: v7x
topology: tpu7x:2x2x1
jax: 0.10.0
libtpu: 0.0.40
codegen_flags: <defaults>
</compile_context>

<pallas_src>
import functools

import jax
import jax.numpy as jnp
from jax.experimental import pallas as pl
from jax.experimental.pallas import tpu as pltpu

BN_EPS = 1e-5


def _round_up(n, m=128):
    return ((n + m - 1) // m) * m


def generator_kernel(
    x_ref, y_ref,
    wy_ref,                              # fused y-side weight (yf_dim, h1p+h2p+h3p+outp)
    w1x_ref, w2h_ref, w3h_ref, w4h_ref,  # activation-side weights (in, out), padded
    b4_ref,                              # output bias (b1..b3 cancelled by BN)
    g1_ref, be1_ref, g2_ref, be2_ref, g3_ref, be3_ref,
    o_ref,
    *, h1p, h2p, h3p,
):
    x = x_ref[...]
    y = y_ref[...]

    # One wide MXU matmul covers the y-side contribution of all four layers.
    ycontrib = jnp.dot(y, wy_ref[...], preferred_element_type=jnp.float32)
    yc1 = ycontrib[:, :h1p]
    yc2 = ycontrib[:, h1p:h1p + h2p]
    yc3 = ycontrib[:, h1p + h2p:h1p + h2p + h3p]
    yc4 = ycontrib[:, h1p + h2p + h3p:]

    inv_b = 1.0 / x.shape[0]  # static batch size

    def bn_relu(h, gamma, beta):
        # Single-pass batch statistics (biased variance == BatchNorm1d training mode).
        s1 = jnp.sum(h, axis=0, keepdims=True)
        s2 = jnp.sum(h * h, axis=0, keepdims=True)
        mu = s1 * inv_b
        var = s2 * inv_b - mu * mu
        scale = gamma * jax.lax.rsqrt(var + BN_EPS)   # fold gamma into the scale
        shift = beta - mu * scale
        return jnp.maximum(h * scale + shift, 0.0)    # ReLU (default activation)

    # layer 1: proj1(cat(x, yf)) -> bn1 -> relu
    h = jnp.dot(x, w1x_ref[...], preferred_element_type=jnp.float32) + yc1
    h = bn_relu(h, g1_ref[...], be1_ref[...])

    # layer 2: proj2(cat(h1, yf)) -> bn2 -> relu
    h = jnp.dot(h, w2h_ref[...], preferred_element_type=jnp.float32) + yc2
    h = bn_relu(h, g2_ref[...], be2_ref[...])

    # layer 3: proj3(cat(h2, yf)) -> bn3 -> relu
    h = jnp.dot(h, w3h_ref[...], preferred_element_type=jnp.float32) + yc3
    h = bn_relu(h, g3_ref[...], be3_ref[...])

    # output layer: proj_output(cat(h3, yf)), no BN / activation
    o_ref[...] = (jnp.dot(h, w4h_ref[...], preferred_element_type=jnp.float32)
                  + yc4 + b4_ref[...])


def init_params(key, latent_dim, embedd_dim, vocab_size, h1, h2, h3, out_dim):
    """Deterministic parameter init matching PyTorch default shapes/inits."""
    yf_dim = embedd_dim * vocab_size
    in_dim = latent_dim + yf_dim

    def linear(k, fan_in, fan_out):
        kw, kb = jax.random.split(k)
        bound = 1.0 / jnp.sqrt(float(fan_in))
        # stored as (in, out)  == PyTorch weight (out, in) transposed
        w = jax.random.uniform(kw, (fan_in, fan_out), jnp.float32, -bound, bound)
        b = jax.random.uniform(kb, (1, fan_out), jnp.float32, -bound, bound)
        return w, b

    k_emb, k1, k2, k3, k4 = jax.random.split(key, 5)
    params = {}
    params["embedding"] = jax.random.normal(k_emb, (vocab_size, embedd_dim), jnp.float32)

    w1, params["b1"] = linear(k1, in_dim, h1)
    params["w1x"], params["w1y"] = w1[:latent_dim], w1[latent_dim:]
    w2, params["b2"] = linear(k2, h1 + yf_dim, h2)
    params["w2h"], params["w2y"] = w2[:h1], w2[h1:]
    w3, params["b3"] = linear(k3, h2 + yf_dim, h3)
    params["w3h"], params["w3y"] = w3[:h2], w3[h2:]
    w4, params["b4"] = linear(k4, h3 + yf_dim, out_dim)
    params["w4h"], params["w4y"] = w4[:h3], w4[h3:]

    for i, hdim in ((1, h1), (2, h2), (3, h3)):  # BatchNorm affine defaults
        params[f"g{i}"] = jnp.ones((1, hdim), jnp.float32)
        params[f"be{i}"] = jnp.zeros((1, hdim), jnp.float32)
    return params


def pack_params(params, h1, h2, h3, out_dim):
    """Pad feature dims to multiples of 128 (lane-dense) and fuse the y-side
    weights of all four layers along the output axis.  b1/b2/b3 are dropped:
    training-mode BN's mean subtraction cancels them exactly."""
    h1p, h2p, h3p, outp = (_round_up(d) for d in (h1, h2, h3, out_dim))

    def pad_c(a, cols):
        return jnp.pad(a, ((0, 0), (0, cols - a.shape[1])))

    def pad_rc(a, rows, cols):
        return jnp.pad(a, ((0, rows - a.shape[0]), (0, cols - a.shape[1])))

    packed = dict(
        embedding=params["embedding"],
        wy=jnp.concatenate([pad_c(params["w1y"], h1p),
                            pad_c(params["w2y"], h2p),
                            pad_c(params["w3y"], h3p),
                            pad_c(params["w4y"], outp)], axis=1),
        w1x=pad_c(params["w1x"], h1p),
        w2h=pad_rc(params["w2h"], h1p, h2p),
        w3h=pad_rc(params["w3h"], h2p, h3p),
        w4h=pad_rc(params["w4h"], h3p, outp),
        b4=pad_c(params["b4"], outp),
        g1=pad_c(params["g1"], h1p), be1=pad_c(params["be1"], h1p),
        g2=pad_c(params["g2"], h2p), be2=pad_c(params["be2"], h2p),
        g3=pad_c(params["g3"], h3p), be3=pad_c(params["be3"], h3p),
    )
    packed["dims"] = (h1p, h2p, h3p, outp, out_dim)
    return packed


def generator_forward(packed, x, y_onehot):
    """x: (B, latent_dim) noise; y_onehot: (B, C, vocab_size) one-hot along dim 1
    (if 1-D, treated as integer class ids, mirroring the PyTorch module)."""
    # glue: argmax + embedding gather + flatten (index preprocessing, plain JAX)
    y_idx = (jnp.argmax(y_onehot, axis=1) if y_onehot.ndim > 1
             else y_onehot.astype(jnp.int32))
    y_flat = packed["embedding"][y_idx].reshape(x.shape[0], -1)

    h1p, h2p, h3p, outp, out_dim = packed["dims"]
    B = x.shape[0]

    args = (x, y_flat, packed["wy"],
            packed["w1x"], packed["w2h"], packed["w3h"], packed["w4h"],
            packed["b4"],
            packed["g1"], packed["be1"], packed["g2"], packed["be2"],
            packed["g3"], packed["be3"])

    vmem_spec = pl.BlockSpec(memory_space=pltpu.MemorySpace.VMEM)
    out_padded = pl.pallas_call(
        functools.partial(generator_kernel, h1p=h1p, h2p=h2p, h3p=h3p),
        out_shape=jax.ShapeDtypeStruct((B, outp), jnp.float32),
        in_specs=[vmem_spec] * len(args),
        out_specs=vmem_spec,
    )(*args)
    return out_padded[:, :out_dim]


def _reference_forward(params, x, y_onehot):
    """Plain-JAX reference of the original module semantics (with biases,
    two-pass BN) for a sanity check."""
    y_idx = jnp.argmax(y_onehot, axis=1)
    yf = params["embedding"][y_idx].reshape(x.shape[0], -1)

    def bn_relu(h, g, b):
        mu = h.mean(0, keepdims=True)
        var = ((h - mu) ** 2).mean(0, keepdims=True)
        return jnp.maximum((h - mu) / jnp.sqrt(var + BN_EPS) * g + b, 0.0)

    h = bn_relu(x @ params["w1x"] + yf @ params["w1y"] + params["b1"],
                params["g1"], params["be1"])
    h = bn_relu(h @ params["w2h"] + yf @ params["w2y"] + params["b2"],
                params["g2"], params["be2"])
    h = bn_relu(h @ params["w3h"] + yf @ params["w3y"] + params["b3"],
                params["g3"], params["be3"])
    return h @ params["w4h"] + yf @ params["w4y"] + params["b4"]


if __name__ == "__main__":
    # small, shape-consistent configuration
    B = 8
    latent_dim = 16
    embedd_dim = 4
    vocab_size = 8       # y_flat dim = 32, proj1 input_dim = 48
    hidden1 = hidden2 = hidden3 = 32
    output_dim = 16

    key = jax.random.PRNGKey(0)
    k_p, k_x, k_y = jax.random.split(key, 3)

    params = init_params(k_p, latent_dim, embedd_dim, vocab_size,
                         hidden1, hidden2, hidden3, output_dim)
    packed = pack_params(params, hidden1, hidden2, hidden3, output_dim)

    x = jax.random.normal(k_x, (B, latent_dim), jnp.float32)
    # y: one-hot along dim=1, shape (B, vocab_size, vocab_size)
    y_classes = jax.random.randint(k_y, (B, vocab_size), 0, vocab_size)
    y_onehot = jax.nn.one_hot(y_classes, vocab_size, axis=1).astype(jnp.float32)

    out = generator_forward(packed, x, y_onehot)
    out = jax.block_until_ready(out)

    ref = _reference_forward(params, x, y_onehot)
    assert out.shape == (B, output_dim)
    assert jnp.allclose(out, ref, atol=1e-3, rtol=1e-3), \
        float(jnp.max(jnp.abs(out - ref)))

    print("KERNEL_OK")
</pallas_src>

<mosaic_0001>
module attributes {stable_mosaic.version = 11 : i64} {
  func.func @generator_kernel(%arg0: memref<8x16xf32, #tpu.memory_space<vmem>>, %arg1: memref<8x32xf32, #tpu.memory_space<vmem>>, %arg2: memref<32x512xf32, #tpu.memory_space<vmem>>, %arg3: memref<16x128xf32, #tpu.memory_space<vmem>>, %arg4: memref<128x128xf32, #tpu.memory_space<vmem>>, %arg5: memref<128x128xf32, #tpu.memory_space<vmem>>, %arg6: memref<128x128xf32, #tpu.memory_space<vmem>>, %arg7: memref<1x128xf32, #tpu.memory_space<vmem>>, %arg8: memref<1x128xf32, #tpu.memory_space<vmem>>, %arg9: memref<1x128xf32, #tpu.memory_space<vmem>>, %arg10: memref<1x128xf32, #tpu.memory_space<vmem>>, %arg11: memref<1x128xf32, #tpu.memory_space<vmem>>, %arg12: memref<1x128xf32, #tpu.memory_space<vmem>>, %arg13: memref<1x128xf32, #tpu.memory_space<vmem>>, %arg14: memref<8x128xf32, #tpu.memory_space<vmem>>) attributes {dimension_semantics = [], scalar_prefetch = 0 : i64, scratch_operands = 0 : i64, tpu.core_type = #tpu.core_type<tc>} {
    %c0 = arith.constant 0 : index
    %c0_0 = arith.constant 0 : index
    %0 = vector.load %arg0[%c0, %c0_0] : memref<8x16xf32, #tpu.memory_space<vmem>>, vector<8x16xf32>
    %c0_1 = arith.constant 0 : index
    %c0_2 = arith.constant 0 : index
    %1 = vector.load %arg1[%c0_1, %c0_2] : memref<8x32xf32, #tpu.memory_space<vmem>>, vector<8x32xf32>
    %c0_3 = arith.constant 0 : index
    %c0_4 = arith.constant 0 : index
    %2 = vector.load %arg2[%c0_3, %c0_4] : memref<32x512xf32, #tpu.memory_space<vmem>>, vector<32x512xf32>
    %cst = arith.constant dense<0.000000e+00> : vector<8x512xf32>
    %3 = tpu.matmul %1, %2, %cst {dimension_numbers = #tpu.dot_dimension_numbers<[1], [0], [0], [1], [0, 0, 1, 1], [], []>} : vector<8x32xf32>, vector<32x512xf32>, vector<8x512xf32> -> vector<8x512xf32>
    %4 = vector.extract_strided_slice %3 {offsets = [0, 0], sizes = [8, 128], strides = [1, 1]} : vector<8x512xf32> to vector<8x128xf32>
    %5 = vector.extract_strided_slice %3 {offsets = [0, 128], sizes = [8, 128], strides = [1, 1]} : vector<8x512xf32> to vector<8x128xf32>
    %6 = vector.extract_strided_slice %3 {offsets = [0, 256], sizes = [8, 128], strides = [1, 1]} : vector<8x512xf32> to vector<8x128xf32>
    %7 = vector.extract_strided_slice %3 {offsets = [0, 384], sizes = [8, 128], strides = [1, 1]} : vector<8x512xf32> to vector<8x128xf32>
    %c0_5 = arith.constant 0 : index
    %c0_6 = arith.constant 0 : index
    %8 = vector.load %arg3[%c0_5, %c0_6] : memref<16x128xf32, #tpu.memory_space<vmem>>, vector<16x128xf32>
    %cst_7 = arith.constant dense<0.000000e+00> : vector<8x128xf32>
    %9 = tpu.matmul %0, %8, %cst_7 {dimension_numbers = #tpu.dot_dimension_numbers<[1], [0], [0], [1], [0, 0, 1, 1], [], []>} : vector<8x16xf32>, vector<16x128xf32>, vector<8x128xf32> -> vector<8x128xf32>
    %10 = arith.addf %9, %4 : vector<8x128xf32>
    %c0_8 = arith.constant 0 : index
    %c0_9 = arith.constant 0 : index
    %11 = vector.load %arg8[%c0_8, %c0_9] : memref<1x128xf32, #tpu.memory_space<vmem>>, vector<1x128xf32>
    %c0_10 = arith.constant 0 : index
    %c0_11 = arith.constant 0 : index
    %12 = vector.load %arg9[%c0_10, %c0_11] : memref<1x128xf32, #tpu.memory_space<vmem>>, vector<1x128xf32>
    %cst_12 = arith.constant dense<0.000000e+00> : vector<128xf32>
    %13 = vector.multi_reduction <add>, %10, %cst_12 [0] : vector<8x128xf32> to vector<128xf32>
    %14 = vector.shape_cast %13 : vector<128xf32> to vector<1x128xf32>
    %15 = arith.mulf %10, %10 : vector<8x128xf32>
    %cst_13 = arith.constant dense<0.000000e+00> : vector<128xf32>
    %16 = vector.multi_reduction <add>, %15, %cst_13 [0] : vector<8x128xf32> to vector<128xf32>
    %17 = vector.shape_cast %16 : vector<128xf32> to vector<1x128xf32>
    %cst_14 = arith.constant 1.250000e-01 : f32
    %18 = vector.broadcast %cst_14 : f32 to vector<1x128xf32>
    %19 = arith.mulf %14, %18 : vector<1x128xf32>
    %cst_15 = arith.constant 1.250000e-01 : f32
    %20 = vector.broadcast %cst_15 : f32 to vector<1x128xf32>
    %21 = arith.mulf %17, %20 : vector<1x128xf32>
    %22 = arith.mulf %19, %19 : vector<1x128xf32>
    %23 = arith.subf %21, %22 : vector<1x128xf32>
    %cst_16 = arith.constant 9.99999974E-6 : f32
    %24 = vector.broadcast %cst_16 : f32 to vector<1x128xf32>
    %25 = arith.addf %23, %24 : vector<1x128xf32>
    %26 = math.rsqrt %25 : vector<1x128xf32>
    %27 = arith.mulf %11, %26 : vector<1x128xf32>
    %28 = arith.mulf %19, %27 : vector<1x128xf32>
    %29 = arith.subf %12, %28 : vector<1x128xf32>
    %30 = vector.broadcast %27 : vector<1x128xf32> to vector<8x128xf32>
    %31 = arith.mulf %10, %30 : vector<8x128xf32>
    %32 = vector.broadcast %29 : vector<1x128xf32> to vector<8x128xf32>
    %33 = arith.addf %31, %32 : vector<8x128xf32>
    %cst_17 = arith.constant 0.000000e+00 : f32
    %34 = vector.broadcast %cst_17 : f32 to vector<8x128xf32>
    %35 = arith.maximumf %33, %34 : vector<8x128xf32>
    %c0_18 = arith.constant 0 : index
    %c0_19 = arith.constant 0 : index
    %36 = vector.load %arg4[%c0_18, %c0_19] : memref<128x128xf32, #tpu.memory_space<vmem>>, vector<128x128xf32>
    %cst_20 = arith.constant dense<0.000000e+00> : vector<8x128xf32>
    %37 = tpu.matmul %35, %36, %cst_20 {dimension_numbers = #tpu.dot_dimension_numbers<[1], [0], [0], [1], [0, 0, 1, 1], [], []>} : vector<8x128xf32>, vector<128x128xf32>, vector<8x128xf32> -> vector<8x128xf32>
    %38 = arith.addf %37, %5 : vector<8x128xf32>
    %c0_21 = arith.constant 0 : index
    %c0_22 = arith.constant 0 : index
    %39 = vector.load %arg10[%c0_21, %c0_22] : memref<1x128xf32, #tpu.memory_space<vmem>>, vector<1x128xf32>
    %c0_23 = arith.constant 0 : index
    %c0_24 = arith.constant 0 : index
    %40 = vector.load %arg11[%c0_23, %c0_24] : memref<1x128xf32, #tpu.memory_space<vmem>>, vector<1x128xf32>
    %cst_25 = arith.constant dense<0.000000e+00> : vector<128xf32>
    %41 = vector.multi_reduction <add>, %38, %cst_25 [0] : vector<8x128xf32> to vector<128xf32>
    %42 = vector.shape_cast %41 : vector<128xf32> to vector<1x128xf32>
    %43 = arith.mulf %38, %38 : vector<8x128xf32>
    %cst_26 = arith.constant dense<0.000000e+00> : vector<128xf32>
    %44 = vector.multi_reduction <add>, %43, %cst_26 [0] : vector<8x128xf32> to vector<128xf32>
    %45 = vector.shape_cast %44 : vector<128xf32> to vector<1x128xf32>
    %cst_27 = arith.constant 1.250000e-01 : f32
    %46 = vector.broadcast %cst_27 : f32 to vector<1x128xf32>
    %47 = arith.mulf %42, %46 : vector<1x128xf32>
    %cst_28 = arith.constant 1.250000e-01 : f32
    %48 = vector.broadcast %cst_28 : f32 to vector<1x128xf32>
    %49 = arith.mulf %45, %48 : vector<1x128xf32>
    %50 = arith.mulf %47, %47 : vector<1x128xf32>
    %51 = arith.subf %49, %50 : vector<1x128xf32>
    %cst_29 = arith.constant 9.99999974E-6 : f32
    %52 = vector.broadcast %cst_29 : f32 to vector<1x128xf32>
    %53 = arith.addf %51, %52 : vector<1x128xf32>
    %54 = math.rsqrt %53 : vector<1x128xf32>
    %55 = arith.mulf %39, %54 : vector<1x128xf32>
    %56 = arith.mulf %47, %55 : vector<1x128xf32>
    %57 = arith.subf %40, %56 : vector<1x128xf32>
    %58 = vector.broadcast %55 : vector<1x128xf32> to vector<8x128xf32>
    %59 = arith.mulf %38, %58 : vector<8x128xf32>
    %60 = vector.broadcast %57 : vector<1x128xf32> to vector<8x128xf32>
    %61 = arith.addf %59, %60 : vector<8x128xf32>
    %cst_30 = arith.constant 0.000000e+00 : f32
    %62 = vector.broadcast %cst_30 : f32 to vector<8x128xf32>
    %63 = arith.maximumf %61, %62 : vector<8x128xf32>
    %c0_31 = arith.constant 0 : index
    %c0_32 = arith.constant 0 : index
    %64 = vector.load %arg5[%c0_31, %c0_32] : memref<128x128xf32, #tpu.memory_space<vmem>>, vector<128x128xf32>
    %cst_33 = arith.constant dense<0.000000e+00> : vector<8x128xf32>
    %65 = tpu.matmul %63, %64, %cst_33 {dimension_numbers = #tpu.dot_dimension_numbers<[1], [0], [0], [1], [0, 0, 1, 1], [], []>} : vector<8x128xf32>, vector<128x128xf32>, vector<8x128xf32> -> vector<8x128xf32>
    %66 = arith.addf %65, %6 : vector<8x128xf32>
    %c0_34 = arith.constant 0 : index
    %c0_35 = arith.constant 0 : index
    %67 = vector.load %arg12[%c0_34, %c0_35] : memref<1x128xf32, #tpu.memory_space<vmem>>, vector<1x128xf32>
    %c0_36 = arith.constant 0 : index
    %c0_37 = arith.constant 0 : index
    %68 = vector.load %arg13[%c0_36, %c0_37] : memref<1x128xf32, #tpu.memory_space<vmem>>, vector<1x128xf32>
    %cst_38 = arith.constant dense<0.000000e+00> : vector<128xf32>
    %69 = vector.multi_reduction <add>, %66, %cst_38 [0] : vector<8x128xf32> to vector<128xf32>
    %70 = vector.shape_cast %69 : vector<128xf32> to vector<1x128xf32>
    %71 = arith.mulf %66, %66 : vector<8x128xf32>
    %cst_39 = arith.constant dense<0.000000e+00> : vector<128xf32>
    %72 = vector.multi_reduction <add>, %71, %cst_39 [0] : vector<8x128xf32> to vector<128xf32>
    %73 = vector.shape_cast %72 : vector<128xf32> to vector<1x128xf32>
    %cst_40 = arith.constant 1.250000e-01 : f32
    %74 = vector.broadcast %cst_40 : f32 to vector<1x128xf32>
    %75 = arith.mulf %70, %74 : vector<1x128xf32>
    %cst_41 = arith.constant 1.250000e-01 : f32
    %76 = vector.broadcast %cst_41 : f32 to vector<1x128xf32>
    %77 = arith.mulf %73, %76 : vector<1x128xf32>
    %78 = arith.mulf %75, %75 : vector<1x128xf32>
    %79 = arith.subf %77, %78 : vector<1x128xf32>
    %cst_42 = arith.constant 9.99999974E-6 : f32
    %80 = vector.broadcast %cst_42 : f32 to vector<1x128xf32>
    %81 = arith.addf %79, %80 : vector<1x128xf32>
    %82 = math.rsqrt %81 : vector<1x128xf32>
    %83 = arith.mulf %67, %82 : vector<1x128xf32>
    %84 = arith.mulf %75, %83 : vector<1x128xf32>
    %85 = arith.subf %68, %84 : vector<1x128xf32>
    %86 = vector.broadcast %83 : vector<1x128xf32> to vector<8x128xf32>
    %87 = arith.mulf %66, %86 : vector<8x128xf32>
    %88 = vector.broadcast %85 : vector<1x128xf32> to vector<8x128xf32>
    %89 = arith.addf %87, %88 : vector<8x128xf32>
    %cst_43 = arith.constant 0.000000e+00 : f32
    %90 = vector.broadcast %cst_43 : f32 to vector<8x128xf32>
    %91 = arith.maximumf %89, %90 : vector<8x128xf32>
    %c0_44 = arith.constant 0 : index
    %c0_45 = arith.constant 0 : index
    %92 = vector.load %arg6[%c0_44, %c0_45] : memref<128x128xf32, #tpu.memory_space<vmem>>, vector<128x128xf32>
    %cst_46 = arith.constant dense<0.000000e+00> : vector<8x128xf32>
    %93 = tpu.matmul %91, %92, %cst_46 {dimension_numbers = #tpu.dot_dimension_numbers<[1], [0], [0], [1], [0, 0, 1, 1], [], []>} : vector<8x128xf32>, vector<128x128xf32>, vector<8x128xf32> -> vector<8x128xf32>
    %94 = arith.addf %93, %7 : vector<8x128xf32>
    %c0_47 = arith.constant 0 : index
    %c0_48 = arith.constant 0 : index
    %95 = vector.load %arg7[%c0_47, %c0_48] : memref<1x128xf32, #tpu.memory_space<vmem>>, vector<1x128xf32>
    %96 = vector.broadcast %95 : vector<1x128xf32> to vector<8x128xf32>
    %97 = arith.addf %94, %96 : vector<8x128xf32>
    %c0_49 = arith.constant 0 : index
    %c0_50 = arith.constant 0 : index
    %98 = vector.load %arg14[%c0_49, %c0_50] : memref<8x128xf32, #tpu.memory_space<vmem>>, vector<8x128xf32>
    tpu.vector_store %arg14[%c0_49, %c0_50], %97 {strides = array<i32>} : memref<8x128xf32, #tpu.memory_space<vmem>>, vector<8x128xf32>,
    return
  }
}

</mosaic_0001>

<llo_original>
// kernel: tpu_custom_call.1
$region0: #{tpu_custom_call.1}
  #allocation0 [shape = 'u32[]', space=smem, size = 0x4, offset = 0x4, fixed_abs, tag = 'smem constant byte address 0x4 - core index']
  #allocation1 [shape = 'u32[144,128]{1,0:T(1,128)}', space=vmem, size = 0x12000, scoped, tag = 'internal scratch']
  %s0 = inlined_call_operand.hbm [shape: f32[8,16], index: 0, kind: input, shape index: {}]
  %s1 = inlined_call_operand.hbm [shape: f32[8,32], index: 1, kind: input, shape index: {}]
  %s2 = inlined_call_operand.hbm [shape: f32[32,512], index: 2, kind: input, shape index: {}]
  %s3 = inlined_call_operand.hbm [shape: f32[16,128], index: 3, kind: input, shape index: {}]
  %s4 = inlined_call_operand.hbm [shape: f32[128,128], index: 4, kind: input, shape index: {}]
  %s5 = inlined_call_operand.hbm [shape: f32[128,128], index: 5, kind: input, shape index: {}]
  %s6 = inlined_call_operand.hbm [shape: f32[128,128], index: 6, kind: input, shape index: {}]
  %s7 = inlined_call_operand.vmem [shape: f32[1,128], index: 7, kind: input, shape index: {}]
  %s8 = inlined_call_operand.vmem [shape: f32[1,128], index: 8, kind: input, shape index: {}]
  %s9 = inlined_call_operand.vmem [shape: f32[1,128], index: 9, kind: input, shape index: {}]
  %s10 = inlined_call_operand.vmem [shape: f32[1,128], index: 10, kind: input, shape index: {}]
  %s11 = inlined_call_operand.vmem [shape: f32[1,128], index: 11, kind: input, shape index: {}]
  %s12 = inlined_call_operand.vmem [shape: f32[1,128], index: 12, kind: input, shape index: {}]
  %s13 = inlined_call_operand.vmem [shape: f32[1,128], index: 13, kind: input, shape index: {}]
  %s14 = inlined_call_operand.hbm [shape: f32[8,128], index: 14, kind: output, shape index: {}]
  %s15 = sld [smem:[#allocation0]]
  $region94: #{tpu_custom_call.1} parent=0
    _
  %s17 = ssub.s32 1, %s15
  %s18 = scalar_select 0, %s17, %s15
  $region1: #{tpu_custom_call.1} parent=0
    #allocation2 [shape = 'u8[4096]{0}', space=vmem, size = 0x1000, scoped, tag = 'input window, operand 0, single buffered']
    #allocation3 [shape = 's32[1]{0}', space=sflag, size = 0x4, scoped, tag = 'scoped memory for tpu_custom_call.1']
    #allocation4 [shape = 's32[1]{0}', space=sflag, size = 0x4, scoped, tag = 'scoped memory for tpu_custom_call.1']
    #allocation5 [shape = 'u8[4096]{0}', space=vmem, size = 0x1000, scoped, tag = 'input window, operand 1, single buffered']
    #allocation6 [shape = 's32[1]{0}', space=sflag, size = 0x4, scoped, tag = 'scoped memory for tpu_custom_call.1']
    #allocation7 [shape = 'u8[65536]{0}', space=vmem, size = 0x10000, scoped, tag = 'input window, operand 2, single buffered']
    #allocation8 [shape = 'u8[8192]{0}', space=vmem, size = 0x2000, scoped, tag = 'input window, operand 3, single buffered']
    #allocation9 [shape = 's32[1]{0}', space=sflag, size = 0x4, scoped, tag = 'scoped memory for tpu_custom_call.1']
    #allocation10 [shape = 'u8[65536]{0}', space=vmem, size = 0x10000, scoped, tag = 'input window, operand 4, single buffered']
    #allocation11 [shape = 'u8[65536]{0}', space=vmem, size = 0x10000, scoped, tag = 'input window, operand 5, single buffered']
    #allocation12 [shape = 's32[1]{0}', space=sflag, size = 0x4, scoped, tag = 'scoped memory for tpu_custom_call.1']
    #allocation13 [shape = 'u8[65536]{0}', space=vmem, size = 0x10000, scoped, tag = 'input window, operand 6, single buffered']
    #allocation14 [shape = 'u8[4096]{0}', space=vmem, size = 0x1000, scoped, tag = 'output window, operand 0, single buffered']
    %19 = vsyncpa [#allocation3], 0
    %20 = vsyncpa [#allocation6], 0
    %21 = vsyncpa [#allocation9], 0
    %22 = vsyncpa [#allocation12], 0
    %23 = vsyncpa [#allocation4], 0
    // Predicated region
    $region2: #{tpu_custom_call.1} parent=1 // pred_check
      _
    $region3: #{tpu_custom_call.1} parent=1 // pred_check_branch
      %25 = sbr.rel (0) target = $region5
    $region4: #{tpu_custom_call.1} parent=1 // pred_region
      %s27 = ssub.s32 128, 128
      %28 = vsyncadd [#allocation3], %s27
      %s30 = sshll.u32 [#allocation2], 4
      %s31 = int_to_ptr.vmem [resolvable:$true] %s30
      %33 = dma.hbm_to_vmem [thread:$0]  %s0, 128, %s31, [#allocation3]
    $region5: #{tpu_custom_call.1} parent=1 // pred_fallthru
      _
    // Predicated region
    $region6: #{tpu_custom_call.1} parent=1 // pred_check
      _
    $region7: #{tpu_custom_call.1} parent=1 // pred_check_branch
      %35 = sbr.rel (0) target = $region9
    $region8: #{tpu_custom_call.1} parent=1 // pred_region
      %s37 = ssub.s32 128, 128
      %38 = vsyncadd [#allocation6], %s37
      %s40 = sshll.u32 [#allocation5], 4
      %s41 = int_to_ptr.vmem [resolvable:$true] %s40
      %43 = dma.hbm_to_vmem [thread:$0]  %s1, 128, %s41, [#allocation6]
    $region9: #{tpu_custom_call.1} parent=1 // pred_fallthru
      _
    // Predicated region
    $region10: #{tpu_custom_call.1} parent=1 // pred_check
      _
    $region11: #{tpu_custom_call.1} parent=1 // pred_check_branch
      %45 = sbr.rel (0) target = $region13
    $region12: #{tpu_custom_call.1} parent=1 // pred_region
      %s47 = ssub.s32 2048, 2048
      %48 = vsyncadd [#allocation6], %s47
      %s49 = sshll.u32 [#allocation7], 4
      %s50 = int_to_ptr.vmem [resolvable:$true] %s49
      %55 = dma.hbm_to_vmem [thread:$0]  %s2, 2048, %s50, [#allocation6], 512, 512, 32
    $region13: #{tpu_custom_call.1} parent=1 // pred_fallthru
      _
    // Predicated region
    $region14: #{tpu_custom_call.1} parent=1 // pred_check
      _
    $region15: #{tpu_custom_call.1} parent=1 // pred_check_branch
      %57 = sbr.rel (0) target = $region17
    $region16: #{tpu_custom_call.1} parent=1 // pred_region
      %s59 = ssub.s32 256, 256
      %60 = vsyncadd [#allocation9], %s59
      %s61 = sshll.u32 [#allocation8], 4
      %s62 = int_to_ptr.vmem [resolvable:$true] %s61
      %67 = dma.hbm_to_vmem [thread:$0]  %s3, 256, %s62, [#allocation9], 128, 128, 8
    $region17: #{tpu_custom_call.1} parent=1 // pred_fallthru
      _
    // Predicated region
    $region18: #{tpu_custom_call.1} parent=1 // pred_check
      _
    $region19: #{tpu_custom_call.1} parent=1 // pred_check_branch
      %69 = sbr.rel (0) target = $region21
    $region20: #{tpu_custom_call.1} parent=1 // pred_region
      %s71 = ssub.s32 2048, 2048
      %72 = vsyncadd [#allocation9], %s71
      %s73 = sshll.u32 [#allocation10], 4
      %s74 = int_to_ptr.vmem [resolvable:$true] %s73
      %79 = dma.hbm_to_vmem [thread:$0]  %s4, 2048, %s74, [#allocation9], 128, 128, 8
    $region21: #{tpu_custom_call.1} parent=1 // pred_fallthru
      _
    // Predicated region
    $region22: #{tpu_custom_call.1} parent=1 // pred_check
      _
    $region23: #{tpu_custom_call.1} parent=1 // pred_check_branch
      %81 = sbr.rel (0) target = $region25
    $region24: #{tpu_custom_call.1} parent=1 // pred_region
      %s83 = ssub.s32 2048, 2048
      %84 = vsyncadd [#allocation12], %s83
      %s85 = sshll.u32 [#allocation11], 4
      %s86 = int_to_ptr.vmem [resolvable:$true] %s85
      %91 = dma.hbm_to_vmem [thread:$0]  %s5, 2048, %s86, [#allocation12], 128, 128, 8
    $region25: #{tpu_custom_call.1} parent=1 // pred_fallthru
      _
    // Predicated region
    $region26: #{tpu_custom_call.1} parent=1 // pred_check
      _
    $region27: #{tpu_custom_call.1} parent=1 // pred_check_branch
      %93 = sbr.rel (0) target = $region29
    $region28: #{tpu_custom_call.1} parent=1 // pred_region
      %s95 = ssub.s32 2048, 2048
      %96 = vsyncadd [#allocation12], %s95
      %s97 = sshll.u32 [#allocation13], 4
      %s98 = int_to_ptr.vmem [resolvable:$true] %s97
      %103 = dma.hbm_to_vmem [thread:$0]  %s6, 2048, %s98, [#allocation12], 128, 128, 8
    $region29: #{tpu_custom_call.1} parent=1 // pred_fallthru
      _
    // Predicated region
    $region30: #{tpu_custom_call.1} parent=1 // pred_check
      _
    $region31: #{tpu_custom_call.1} parent=1 // pred_check_branch
      %105 = sbr.rel (0) target = $region33
    $region32: #{tpu_custom_call.1} parent=1 // pred_region
      _
    $region33: #{tpu_custom_call.1} parent=1 // pred_fallthru
      _
    // Predicated region
    $region34: #{tpu_custom_call.1} parent=1 // pred_check
      _
    $region35: #{tpu_custom_call.1} parent=1 // pred_check_branch
      %107 = sbr.rel (0) target = $region37
    $region36: #{tpu_custom_call.1} parent=1 // pred_region
      _
    $region37: #{tpu_custom_call.1} parent=1 // pred_fallthru
      _
    // Predicated region
    $region38: #{tpu_custom_call.1} parent=1 // pred_check
      _
    $region39: #{tpu_custom_call.1} parent=1 // pred_check_branch
      %109 = sbr.rel (0) target = $region41
    $region40: #{tpu_custom_call.1} parent=1 // pred_region
      _
    $region41: #{tpu_custom_call.1} parent=1 // pred_fallthru
      _
    // Predicated region
    $region42: #{tpu_custom_call.1} parent=1 // pred_check
      _
    $region43: #{tpu_custom_call.1} parent=1 // pred_check_branch
      %111 = sbr.rel (0) target = $region45
    $region44: #{tpu_custom_call.1} parent=1 // pred_region
      _
    $region45: #{tpu_custom_call.1} parent=1 // pred_fallthru
      _
    // Predicated region
    $region46: #{tpu_custom_call.1} parent=1 // pred_check
      _
    $region47: #{tpu_custom_call.1} parent=1 // pred_check_branch
      %113 = sbr.rel (0) target = $region49
    $region48: #{tpu_custom_call.1} parent=1 // pred_region
      _
    $region49: #{tpu_custom_call.1} parent=1 // pred_fallthru
      _
    // Predicated region
    $region50: #{tpu_custom_call.1} parent=1 // pred_check
      _
    $region51: #{tpu_custom_call.1} parent=1 // pred_check_branch
      %115 = sbr.rel (0) target = $region53
    $region52: #{tpu_custom_call.1} parent=1 // pred_region
      _
    $region53: #{tpu_custom_call.1} parent=1 // pred_fallthru
      _
    // Predicated region
    $region54: #{tpu_custom_call.1} parent=1 // pred_check
      _
    $region55: #{tpu_custom_call.1} parent=1 // pred_check_branch
      %117 = sbr.rel (0) target = $region57
    $region56: #{tpu_custom_call.1} parent=1 // pred_region
      _
    $region57: #{tpu_custom_call.1} parent=1 // pred_fallthru
      _
    // Predicated region
    $region58: #{tpu_custom_call.1} parent=1 // pred_check
      _
    $region59: #{tpu_custom_call.1} parent=1 // pred_check_branch
      %119 = sbr.rel (0) target = $region61
    $region60: #{tpu_custom_call.1} parent=1 // pred_region
      %120 = dma.done [#allocation3], 128
    $region61: #{tpu_custom_call.1} parent=1 // pred_fallthru
      _
    // Predicated region
    $region62: #{tpu_custom_call.1} parent=1 // pred_check
      _
    $region63: #{tpu_custom_call.1} parent=1 // pred_check_branch
      %122 = sbr.rel (0) target = $region65
    $region64: #{tpu_custom_call.1} parent=1 // pred_region
      %123 = dma.done [#allocation6], 128
    $region65: #{tpu_custom_call.1} parent=1 // pred_fallthru
      _
    // Predicated region
    $region66: #{tpu_custom_call.1} parent=1 // pred_check
      _
    $region67: #{tpu_custom_call.1} parent=1 // pred_check_branch
      %125 = sbr.rel (0) target = $region69
    $region68: #{tpu_custom_call.1} parent=1 // pred_region
      %126 = dma.done [#allocation6], 2048
    $region69: #{tpu_custom_call.1} parent=1 // pred_fallthru
      _
    // Predicated region
    $region70: #{tpu_custom_call.1} parent=1 // pred_check
      _
    $region71: #{tpu_custom_call.1} parent=1 // pred_check_branch
      %128 = sbr.rel (0) target = $region73
    $region72: #{tpu_custom_call.1} parent=1 // pred_region
      %129 = dma.done [#allocation9], 256
    $region73: #{tpu_custom_call.1} parent=1 // pred_fallthru
      _
    // Predicated region
    $region74: #{tpu_custom_call.1} parent=1 // pred_check
      _
    $region75: #{tpu_custom_call.1} parent=1 // pred_check_branch
      %131 = sbr.rel (0) target = $region77
    $region76: #{tpu_custom_call.1} parent=1 // pred_region
      %132 = dma.done [#allocation9], 2048
    $region77: #{tpu_custom_call.1} parent=1 // pred_fallthru
      _
    // Predicated region
    $region78: #{tpu_custom_call.1} parent=1 // pred_check
      _
    $region79: #{tpu_custom_call.1} parent=1 // pred_check_branch
      %134 = sbr.rel (0) target = $region81
    $region80: #{tpu_custom_call.1} parent=1 // pred_region
      %135 = dma.done [#allocation12], 2048
    $region81: #{tpu_custom_call.1} parent=1 // pred_fallthru
      _
    // Predicated region
    $region82: #{tpu_custom_call.1} parent=1 // pred_check
      _
    $region83: #{tpu_custom_call.1} parent=1 // pred_check_branch
      %137 = sbr.rel (0) target = $region85
    $region84: #{tpu_custom_call.1} parent=1 // pred_region
      %138 = dma.done [#allocation12], 2048
    $region85: #{tpu_custom_call.1} parent=1 // pred_fallthru
      _
    %v139 = vld [vmem:[#allocation2] sm:$0xff]
    %v140 = vld [vmem:[#allocation5] sm:$0xff]
    %v141 = vld [vmem:[#allocation7] sm:$0xff]
    %v142 = vld [vmem:[#allocation7 + $0x8] sm:$0xff]
    %v143 = vld [vmem:[#allocation7 + $0x10] sm:$0xff]
    %v144 = vld [vmem:[#allocation7 + $0x18] sm:$0xff]
    %v145 = vld [vmem:[#allocation7 + $0x20] sm:$0xff]
    %v146 = vld [vmem:[#allocation7 + $0x28] sm:$0xff]
    %v147 = vld [vmem:[#allocation7 + $0x30] sm:$0xff]
    %v148 = vld [vmem:[#allocation7 + $0x38] sm:$0xff]
    %v149 = vld [vmem:[#allocation7 + $0x40] sm:$0xff]
    %v150 = vld [vmem:[#allocation7 + $0x48] sm:$0xff]
    %v151 = vld [vmem:[#allocation7 + $0x50] sm:$0xff]
    %v152 = vld [vmem:[#allocation7 + $0x58] sm:$0xff]
    %v153 = vld [vmem:[#allocation7 + $0x60] sm:$0xff]
    %v154 = vld [vmem:[#allocation7 + $0x68] sm:$0xff]
    %v155 = vld [vmem:[#allocation7 + $0x70] sm:$0xff]
    %v156 = vld [vmem:[#allocation7 + $0x78] sm:$0xff]
    %vm157 = vcmask 261120
    %v159 = vsel %vm157, %v140, 0
    %161 = vmatprep.subr.mxu0 %v142
    %162 = vmatpush1.msra.mxu0 %v141
    %163 = vmatprep.subr.mxu0 %v146
    %164 = vmatpush1.msra.mxu0 %v145
    %165 = vmatprep.subr.mxu0 %v150
    %166 = vmatpush1.msra.mxu0 %v149
    %167 = vmatprep.subr.mxu0 %v154
    %168 = vmatpush1.msra.mxu0 %v153
    %169 = vmatprep.subr.mxu0 0.0
    %170 = vmatpush1.msra.mxu0 0.0
    %171 = vmatprep.subr.mxu0 0.0
    %172 = vmatpush1.msra.mxu0 0.0
    %173 = vmatprep.subr.mxu0 0.0
    %174 = vmatpush1.msra.mxu0 0.0
    %175 = vmatprep.subr.mxu0 0.0
    %176 = vmatpush1.msra.mxu0 0.0
    %177 = vmatprep.subr.mxu0 0.0
    %178 = vmatpush1.msra.mxu0 0.0
    %179 = vmatprep.subr.mxu0 0.0
    %180 = vmatpush1.msra.mxu0 0.0
    %181 = vmatprep.subr.mxu0 0.0
    %182 = vmatpush1.msra.mxu0 0.0
    %183 = vmatprep.subr.mxu0 0.0
    %184 = vmatpush1.msra.mxu0 0.0
    %185 = vmatprep.subr.mxu0 0.0
    %186 = vmatpush1.msra.mxu0 0.0
    %187 = vmatprep.subr.mxu0 0.0
    %188 = vmatpush1.msra.mxu0 0.0
    %189 = vmatprep.subr.mxu0 0.0
    %190 = vmatpush1.msra.mxu0 0.0
    %191 = vmatprep.subr.mxu0 0.0
    %192 = vmatpush1.msra.mxu0 0.0
    %193 = vmatprep.subr.mxu0 0.0
    %194 = vmatpush1.msra.mxu0 0.0
    %195 = vmatprep.subr.mxu0 0.0
    %196 = vmatpush1.msra.mxu0 0.0
    %197 = vmatprep.subr.mxu0 0.0
    %198 = vmatpush1.msra.mxu0 0.0
    %199 = vmatprep.subr.mxu0 0.0
    %200 = vmatpush1.msra.mxu0 0.0
    %201 = vmatprep.subr.mxu0 0.0
    %202 = vmatpush1.msra.mxu0 0.0
    %203 = vmatprep.subr.mxu0 0.0
    %204 = vmatpush1.msra.mxu0 0.0
    %205 = vmatprep.subr.mxu0 0.0
    %206 = vmatpush1.msra.mxu0 0.0
    %207 = vmatprep.subr.mxu0 0.0
    %208 = vmatpush1.msra.mxu0 0.0
    %209 = vmatprep.subr.mxu0 0.0
    %210 = vmatpush1.msra.mxu0 0.0
    %211 = vmatprep.subr.mxu0 0.0
    %212 = vmatpush1.msra.mxu0 0.0
    %213 = vmatprep.subr.mxu0 0.0
    %214 = vmatpush1.msra.mxu0 0.0
    %215 = vmatprep.subr.mxu0 0.0
    %216 = vmatpush1.msra.mxu0 0.0
    %217 = vmatprep.subr.mxu0 0.0
    %218 = vmatpush1.msra.mxu0 0.0
    %219 = vmatprep.subr.mxu0 0.0
    %220 = vmatpush1.msra.mxu0 0.0
    %221 = vmatprep.subr.mxu0 0.0
    %222 = vmatpush1.msra.mxu0 0.0
    %223 = vmatprep.subr.mxu0 0.0
    %224 = vmatpush1.msra.mxu0 0.0
    %225 = vmatprep.mubr.f32.mxu0 0.0
    %226 = vmatmul.mubr.f32.gmra.mrb[0].mxu0 %v159
    %v227 = vpop.f32.mrb[0].mxu0
    %v228 = vadd.f32 0.0, %v227
    %v229 = vpop.f32.mrb[0].mxu0
    %v230 = vadd.f32 0.0, %v229
    %231 = vdwg.mxu0
    %232 = vmatprep.subr.mxu0 %v144
    %233 = vmatpush1.msra.mxu0 %v143
    %234 = vmatprep.subr.mxu0 %v148
    %235 = vmatpush1.msra.mxu0 %v147
    %236 = vmatprep.subr.mxu0 %v152
    %237 = vmatpush1.msra.mxu0 %v151
    %238 = vmatprep.subr.mxu0 %v156
    %239 = vmatpush1.msra.mxu0 %v155
    %240 = vmatprep.subr.mxu0 0.0
    %241 = vmatpush1.msra.mxu0 0.0
    %242 = vmatprep.subr.mxu0 0.0
    %243 = vmatpush1.msra.mxu0 0.0
    %244 = vmatprep.subr.mxu0 0.0
    %245 = vmatpush1.msra.mxu0 0.0
    %246 = vmatprep.subr.mxu0 0.0
    %247 = vmatpush1.msra.mxu0 0.0
    %248 = vmatprep.subr.mxu0 0.0
    %249 = vmatpush1.msra.mxu0 0.0
    %250 = vmatprep.subr.mxu0 0.0
    %251 = vmatpush1.msra.mxu0 0.0
    %252 = vmatprep.subr.mxu0 0.0
    %253 = vmatpush1.msra.mxu0 0.0
    %254 = vmatprep.subr.mxu0 0.0
    %255 = vmatpush1.msra.mxu0 0.0
    %256 = vmatprep.subr.mxu0 0.0
    %257 = vmatpush1.msra.mxu0 0.0
    %258 = vmatprep.subr.mxu0 0.0
    %259 = vmatpush1.msra.mxu0 0.0
    %260 = vmatprep.subr.mxu0 0.0
    %261 = vmatpush1.msra.mxu0 0.0
    %262 = vmatprep.subr.mxu0 0.0
    %263 = vmatpush1.msra.mxu0 0.0
    %264 = vmatprep.subr.mxu0 0.0
    %265 = vmatpush1.msra.mxu0 0.0
    %266 = vmatprep.subr.mxu0 0.0
    %267 = vmatpush1.msra.mxu0 0.0
    %268 = vmatprep.subr.mxu0 0.0
    %269 = vmatpush1.msra.mxu0 0.0
    %270 = vmatprep.subr.mxu0 0.0
    %271 = vmatpush1.msra.mxu0 0.0
    %272 = vmatprep.subr.mxu0 0.0
    %273 = vmatpush1.msra.mxu0 0.0
    %274 = vmatprep.subr.mxu0 0.0
    %275 = vmatpush1.msra.mxu0 0.0
    %276 = vmatprep.subr.mxu0 0.0
    %277 = vmatpush1.msra.mxu0 0.0
    %278 = vmatprep.subr.mxu0 0.0
    %279 = vmatpush1.msra.mxu0 0.0
    %280 = vmatprep.subr.mxu0 0.0
    %281 = vmatpush1.msra.mxu0 0.0
    %282 = vmatprep.subr.mxu0 0.0
    %283 = vmatpush1.msra.mxu0 0.0
    %284 = vmatprep.subr.mxu0 0.0
    %285 = vmatpush1.msra.mxu0 0.0
    %286 = vmatprep.subr.mxu0 0.0
    %287 = vmatpush1.msra.mxu0 0.0
    %288 = vmatprep.subr.mxu0 0.0
    %289 = vmatpush1.msra.mxu0 0.0
    %290 = vmatprep.subr.mxu0 0.0
    %291 = vmatpush1.msra.mxu0 0.0
    %292 = vmatprep.subr.mxu0 0.0
    %293 = vmatpush1.msra.mxu0 0.0
    %294 = vmatprep.subr.mxu0 0.0
    %295 = vmatpush1.msra.mxu0 0.0
    %296 = vmatprep.mubr.f32.mxu0 0.0
    %297 = vmatmul.mubr.f32.gmra.mrb[0].mxu0 %v159
    %v298 = vpop.f32.mrb[0].mxu0
    %v299 = vadd.f32 0.0, %v298
    %v300 = vpop.f32.mrb[0].mxu0
    %v301 = vadd.f32 0.0, %v300
    %302 = vdwg.mxu0
    %v303 = vld [vmem:[#allocation8] sm:$0xff]
    %v304 = vld [vmem:[#allocation8 + $0x8] sm:$0xff]
    %vm305 = vcmask 130048
    %v307 = vsel %vm305, %v139, 0
    %309 = vmatprep.subr.mxu0 0.0
    %310 = vmatpush1.msra.mxu0 %v303
    %311 = vmatprep.subr.mxu0 0.0
    %312 = vmatpush1.msra.mxu0 %v304
    %313 = vmatprep.subr.mxu0 0.0
    %314 = vmatpush1.msra.mxu0 0.0
    %315 = vmatprep.subr.mxu0 0.0
    %316 = vmatpush1.msra.mxu0 0.0
    %317 = vmatprep.subr.mxu0 0.0
    %318 = vmatpush1.msra.mxu0 0.0
    %319 = vmatprep.subr.mxu0 0.0
    %320 = vmatpush1.msra.mxu0 0.0
    %321 = vmatprep.subr.mxu0 0.0
    %322 = vmatpush1.msra.mxu0 0.0
    %323 = vmatprep.subr.mxu0 0.0
    %324 = vmatpush1.msra.mxu0 0.0
    %325 = vmatprep.subr.mxu0 0.0
    %326 = vmatpush1.msra.mxu0 0.0
    %327 = vmatprep.subr.mxu0 0.0
    %328 = vmatpush1.msra.mxu0 0.0
    %329 = vmatprep.subr.mxu0 0.0
    %330 = vmatpush1.msra.mxu0 0.0
    %331 = vmatprep.subr.mxu0 0.0
    %332 = vmatpush1.msra.mxu0 0.0
    %333 = vmatprep.subr.mxu0 0.0
    %334 = vmatpush1.msra.mxu0 0.0
    %335 = vmatprep.subr.mxu0 0.0
    %336 = vmatpush1.msra.mxu0 0.0
    %337 = vmatprep.subr.mxu0 0.0
    %338 = vmatpush1.msra.mxu0 0.0
    %339 = vmatprep.subr.mxu0 0.0
    %340 = vmatpush1.msra.mxu0 0.0
    %341 = vmatprep.subr.mxu0 0.0
    %342 = vmatpush1.msra.mxu0 0.0
    %343 = vmatprep.subr.mxu0 0.0
    %344 = vmatpush1.msra.mxu0 0.0
    %345 = vmatprep.subr.mxu0 0.0
    %346 = vmatpush1.msra.mxu0 0.0
    %347 = vmatprep.subr.mxu0 0.0
    %348 = vmatpush1.msra.mxu0 0.0
    %349 = vmatprep.subr.mxu0 0.0
    %350 = vmatpush1.msra.mxu0 0.0
    %351 = vmatprep.subr.mxu0 0.0
    %352 = vmatpush1.msra.mxu0 0.0
    %353 = vmatprep.subr.mxu0 0.0
    %354 = vmatpush1.msra.mxu0 0.0
    %355 = vmatprep.subr.mxu0 0.0
    %356 = vmatpush1.msra.mxu0 0.0
    %357 = vmatprep.subr.mxu0 0.0
    %358 = vmatpush1.msra.mxu0 0.0
    %359 = vmatprep.subr.mxu0 0.0
    %360 = vmatpush1.msra.mxu0 0.0
    %361 = vmatprep.subr.mxu0 0.0
    %362 = vmatpush1.msra.mxu0 0.0
    %363 = vmatprep.subr.mxu0 0.0
    %364 = vmatpush1.msra.mxu0 0.0
    %365 = vmatprep.subr.mxu0 0.0
    %366 = vmatpush1.msra.mxu0 0.0
    %367 = vmatprep.subr.mxu0 0.0
    %368 = vmatpush1.msra.mxu0 0.0
    %369 = vmatprep.subr.mxu0 0.0
    %370 = vmatpush1.msra.mxu0 0.0
    %371 = vmatprep.subr.mxu0 0.0
    %372 = vmatpush1.msra.mxu0 0.0
    %373 = vmatprep.mubr.f32.mxu0 0.0
    %374 = vmatmul.mubr.f32.gmra.mrb[0].mxu0 %v307
    %v375 = vpop.f32.mrb[0].mxu0
    %v376 = vadd.f32 %v228, %v375
    %v377 = vpop.f32.mrb[0].mxu0
    %378 = vdwg.mxu0
    %v379 = vld [vmem:[%s8] sm:$0x1]
    %v380 = vld [vmem:[%s9] sm:$0x1]
    %v381 = vrot.slane %v376, 4
    %v382 = vadd.f32 %v376, %v381
    %v383 = vrot.slane %v382, 2
    %v384 = vadd.f32 %v382, %v383
    %v385 = vrot.slane %v384, 1
    %v386 = vadd.f32 %v384, %v385
    %v387 = vmul.f32 %v376, %v376
    %v388 = vrot.slane %v387, 4
    %v389 = vadd.f32 %v387, %v388
    %v390 = vrot.slane %v389, 2
    %v391 = vadd.f32 %v389, %v390
    %v392 = vrot.slane %v391, 1
    %v393 = vadd.f32 %v391, %v392
    %v394 = vmul.f32 %v386, 0.125
    %v395 = vmul.f32 %v393, 0.125
    %v396 = vmul.f32 %v394, %v394
    %v397 = vsub.f32 %v395, %v396
    %v398 = vadd.f32 %v397, 1e-05
    %v399 = vrsqrt.pop %v398
    %v400 = vmul.f32 %v379, %v399
    %v401 = vmul.f32 %v394, %v400
    %v402 = vsub.f32 %v380, %v401
    %v404 = vlaneseq
    %v405 = vshrl.u32 %v404, 7
    %v406 = vsub.s32 0, %v405
    %v407 = vrot.slane %v400, %v406
    %v409 = vmul.f32 %v376, %v407
    %v411 = vlaneseq
    %v412 = vshrl.u32 %v411, 7
    %v413 = vsub.s32 0, %v412
    %v414 = vrot.slane %v402, %v413
    %v416 = vadd.f32 %v409, %v414
    %v417 = vmax.f32 %v416, 0.0
    %v418 = vld [vmem:[#allocation10] sm:$0xff]
    %v419 = vld [vmem:[#allocation10 + $0x8] sm:$0xff]
    %v420 = vld [vmem:[#allocation10 + $0x10] sm:$0xff]
    %v421 = vld [vmem:[#allocation10 + $0x18] sm:$0xff]
    %v422 = vld [vmem:[#allocation10 + $0x20] sm:$0xff]
    %v423 = vld [vmem:[#allocation10 + $0x28] sm:$0xff]
    %v424 = vld [vmem:[#allocation10 + $0x30] sm:$0xff]
    %v425 = vld [vmem:[#allocation10 + $0x38] sm:$0xff]
    %v426 = vld [vmem:[#allocation10 + $0x40] sm:$0xff]
    %v427 = vld [vmem:[#allocation10 + $0x48] sm:$0xff]
    %v428 = vld [vmem:[#allocation10 + $0x50] sm:$0xff]
    %v429 = vld [vmem:[#allocation10 + $0x58] sm:$0xff]
    %v430 = vld [vmem:[#allocation10 + $0x60] sm:$0xff]
    %v431 = vld [vmem:[#allocation10 + $0x68] sm:$0xff]
    %v432 = vld [vmem:[#allocation10 + $0x70] sm:$0xff]
    %v433 = vld [vmem:[#allocation10 + $0x78] sm:$0xff]
    %434 = vmatprep.subr.mxu0 0.0
    %435 = vmatpush1.msra.mxu0 %v418
    %436 = vmatprep.subr.mxu0 0.0
    %437 = vmatpush1.msra.mxu0 %v419
    %438 = vmatprep.subr.mxu0 0.0
    %439 = vmatpush1.msra.mxu0 %v420
    %440 = vmatprep.subr.mxu0 0.0
    %441 = vmatpush1.msra.mxu0 %v421
    %442 = vmatprep.subr.mxu0 0.0
    %443 = vmatpush1.msra.mxu0 %v422
    %444 = vmatprep.subr.mxu0 0.0
    %445 = vmatpush1.msra.mxu0 %v423
    %446 = vmatprep.subr.mxu0 0.0
    %447 = vmatpush1.msra.mxu0 %v424
    %448 = vmatprep.subr.mxu0 0.0
    %449 = vmatpush1.msra.mxu0 %v425
    %450 = vmatprep.subr.mxu0 0.0
    %451 = vmatpush1.msra.mxu0 %v426
    %452 = vmatprep.subr.mxu0 0.0
    %453 = vmatpush1.msra.mxu0 %v427
    %454 = vmatprep.subr.mxu0 0.0
    %455 = vmatpush1.msra.mxu0 %v428
    %456 = vmatprep.subr.mxu0 0.0
    %457 = vmatpush1.msra.mxu0 %v429
    %458 = vmatprep.subr.mxu0 0.0
    %459 = vmatpush1.msra.mxu0 %v430
    %460 = vmatprep.subr.mxu0 0.0
    %461 = vmatpush1.msra.mxu0 %v431
    %462 = vmatprep.subr.mxu0 0.0
    %463 = vmatpush1.msra.mxu0 %v432
    %464 = vmatprep.subr.mxu0 0.0
    %465 = vmatpush1.msra.mxu0 %v433
    %466 = vmatprep.subr.mxu0 0.0
    %467 = vmatpush1.msra.mxu0 0.0
    %468 = vmatprep.subr.mxu0 0.0
    %469 = vmatpush1.msra.mxu0 0.0
    %470 = vmatprep.subr.mxu0 0.0
    %471 = vmatpush1.msra.mxu0 0.0
    %472 = vmatprep.subr.mxu0 0.0
    %473 = vmatpush1.msra.mxu0 0.0
    %474 = vmatprep.subr.mxu0 0.0
    %475 = vmatpush1.msra.mxu0 0.0
    %476 = vmatprep.subr.mxu0 0.0
    %477 = vmatpush1.msra.mxu0 0.0
    %478 = vmatprep.subr.mxu0 0.0
    %479 = vmatpush1.msra.mxu0 0.0
    %480 = vmatprep.subr.mxu0 0.0
    %481 = vmatpush1.msra.mxu0 0.0
    %482 = vmatprep.subr.mxu0 0.0
    %483 = vmatpush1.msra.mxu0 0.0
    %484 = vmatprep.subr.mxu0 0.0
    %485 = vmatpush1.msra.mxu0 0.0
    %486 = vmatprep.subr.mxu0 0.0
    %487 = vmatpush1.msra.mxu0 0.0
    %488 = vmatprep.subr.mxu0 0.0
    %489 = vmatpush1.msra.mxu0 0.0
    %490 = vmatprep.subr.mxu0 0.0
    %491 = vmatpush1.msra.mxu0 0.0
    %492 = vmatprep.subr.mxu0 0.0
    %493 = vmatpush1.msra.mxu0 0.0
    %494 = vmatprep.subr.mxu0 0.0
    %495 = vmatpush1.msra.mxu0 0.0
    %496 = vmatprep.subr.mxu0 0.0
    %497 = vmatpush1.msra.mxu0 0.0
    %498 = vmatprep.mubr.f32.mxu0 0.0
    %499 = vmatmul.mubr.f32.gmra.mrb[0].mxu0 %v417
    %v500 = vpop.f32.mrb[0].mxu0
    %v501 = vadd.f32 %v230, %v500
    %v502 = vpop.f32.mrb[0].mxu0
    %503 = vdwg.mxu0
    %v504 = vld [vmem:[%s10] sm:$0x1]
    %v505 = vld [vmem:[%s11] sm:$0x1]
    %v506 = vrot.slane %v501, 4
    %v507 = vadd.f32 %v501, %v506
    %v508 = vrot.slane %v507, 2
    %v509 = vadd.f32 %v507, %v508
    %v510 = vrot.slane %v509, 1
    %v511 = vadd.f32 %v509, %v510
    %v512 = vmul.f32 %v501, %v501
    %v513 = vrot.slane %v512, 4
    %v514 = vadd.f32 %v512, %v513
    %v515 = vrot.slane %v514, 2
    %v516 = vadd.f32 %v514, %v515
    %v517 = vrot.slane %v516, 1
    %v518 = vadd.f32 %v516, %v517
    %v519 = vmul.f32 %v511, 0.125
    %v520 = vmul.f32 %v518, 0.125
    %v521 = vmul.f32 %v519, %v519
    %v522 = vsub.f32 %v520, %v521
    %v523 = vadd.f32 %v522, 1e-05
    %v524 = vrsqrt.pop %v523
    %v525 = vmul.f32 %v504, %v524
    %v526 = vmul.f32 %v519, %v525
    %v527 = vsub.f32 %v505, %v526
    %v529 = vlaneseq
    %v530 = vshrl.u32 %v529, 7
    %v531 = vsub.s32 0, %v530
    %v532 = vrot.slane %v525, %v531
    %v534 = vmul.f32 %v501, %v532
    %v536 = vlaneseq
    %v537 = vshrl.u32 %v536, 7
    %v538 = vsub.s32 0, %v537
    %v539 = vrot.slane %v527, %v538
    %v541 = vadd.f32 %v534, %v539
    %v542 = vmax.f32 %v541, 0.0
    %v543 = vld [vmem:[#allocation11] sm:$0xff]
    %v544 = vld [vmem:[#allocation11 + $0x8] sm:$0xff]
    %v545 = vld [vmem:[#allocation11 + $0x10] sm:$0xff]
    %v546 = vld [vmem:[#allocation11 + $0x18] sm:$0xff]
    %v547 = vld [vmem:[#allocation11 + $0x20] sm:$0xff]
    %v548 = vld [vmem:[#allocation11 + $0x28] sm:$0xff]
    %v549 = vld [vmem:[#allocation11 + $0x30] sm:$0xff]
    %v550 = vld [vmem:[#allocation11 + $0x38] sm:$0xff]
    %v551 = vld [vmem:[#allocation11 + $0x40] sm:$0xff]
    %v552 = vld [vmem:[#allocation11 + $0x48] sm:$0xff]
    %v553 = vld [vmem:[#allocation11 + $0x50] sm:$0xff]
    %v554 = vld [vmem:[#allocation11 + $0x58] sm:$0xff]
    %v555 = vld [vmem:[#allocation11 + $0x60] sm:$0xff]
    %v556 = vld [vmem:[#allocation11 + $0x68] sm:$0xff]
    %v557 = vld [vmem:[#allocation11 + $0x70] sm:$0xff]
    %v558 = vld [vmem:[#allocation11 + $0x78] sm:$0xff]
    %559 = vmatprep.subr.mxu0 0.0
    %560 = vmatpush1.msra.mxu0 %v543
    %561 = vmatprep.subr.mxu0 0.0
    %562 = vmatpush1.msra.mxu0 %v544
    %563 = vmatprep.subr.mxu0 0.0
    %564 = vmatpush1.msra.mxu0 %v545
    %565 = vmatprep.subr.mxu0 0.0
    %566 = vmatpush1.msra.mxu0 %v546
    %567 = vmatprep.subr.mxu0 0.0
    %568 = vmatpush1.msra.mxu0 %v547
    %569 = vmatprep.subr.mxu0 0.0
    %570 = vmatpush1.msra.mxu0 %v548
    %571 = vmatprep.subr.mxu0 0.0
    %572 = vmatpush1.msra.mxu0 %v549
    %573 = vmatprep.subr.mxu0 0.0
    %574 = vmatpush1.msra.mxu0 %v550
    %575 = vmatprep.subr.mxu0 0.0
    %576 = vmatpush1.msra.mxu0 %v551
    %577 = vmatprep.subr.mxu0 0.0
    %578 = vmatpush1.msra.mxu0 %v552
    %579 = vmatprep.subr.mxu0 0.0
    %580 = vmatpush1.msra.mxu0 %v553
    %581 = vmatprep.subr.mxu0 0.0
    %582 = vmatpush1.msra.mxu0 %v554
    %583 = vmatprep.subr.mxu0 0.0
    %584 = vmatpush1.msra.mxu0 %v555
    %585 = vmatprep.subr.mxu0 0.0
    %586 = vmatpush1.msra.mxu0 %v556
    %587 = vmatprep.subr.mxu0 0.0
    %588 = vmatpush1.msra.mxu0 %v557
    %589 = vmatprep.subr.mxu0 0.0
    %590 = vmatpush1.msra.mxu0 %v558
    %591 = vmatprep.subr.mxu0 0.0
    %592 = vmatpush1.msra.mxu0 0.0
    %593 = vmatprep.subr.mxu0 0.0
    %594 = vmatpush1.msra.mxu0 0.0
    %595 = vmatprep.subr.mxu0 0.0
    %596 = vmatpush1.msra.mxu0 0.0
    %597 = vmatprep.subr.mxu0 0.0
    %598 = vmatpush1.msra.mxu0 0.0
    %599 = vmatprep.subr.mxu0 0.0
    %600 = vmatpush1.msra.mxu0 0.0
    %601 = vmatprep.subr.mxu0 0.0
    %602 = vmatpush1.msra.mxu0 0.0
    %603 = vmatprep.subr.mxu0 0.0
    %604 = vmatpush1.msra.mxu0 0.0
    %605 = vmatprep.subr.mxu0 0.0
    %606 = vmatpush1.msra.mxu0 0.0
    %607 = vmatprep.subr.mxu0 0.0
    %608 = vmatpush1.msra.mxu0 0.0
    %609 = vmatprep.subr.mxu0 0.0
    %610 = vmatpush1.msra.mxu0 0.0
    %611 = vmatprep.subr.mxu0 0.0
    %612 = vmatpush1.msra.mxu0 0.0
    %613 = vmatprep.subr.mxu0 0.0
    %614 = vmatpush1.msra.mxu0 0.0
    %615 = vmatprep.subr.mxu0 0.0
    %616 = vmatpush1.msra.mxu0 0.0
    %617 = vmatprep.subr.mxu0 0.0
    %618 = vmatpush1.msra.mxu0 0.0
    %619 = vmatprep.subr.mxu0 0.0
    %620 = vmatpush1.msra.mxu0 0.0
    %621 = vmatprep.subr.mxu0 0.0
    %622 = vmatpush1.msra.mxu0 0.0
    %623 = vmatprep.mubr.f32.mxu0 0.0
    %624 = vmatmul.mubr.f32.gmra.mrb[0].mxu0 %v542
    %v625 = vpop.f32.mrb[0].mxu0
    %v626 = vadd.f32 %v299, %v625
    %v627 = vpop.f32.mrb[0].mxu0
    %628 = vdwg.mxu0
    %v629 = vld [vmem:[%s12] sm:$0x1]
    %v630 = vld [vmem:[%s13] sm:$0x1]
    %v631 = vrot.slane %v626, 4
    %v632 = vadd.f32 %v626, %v631
    %v633 = vrot.slane %v632, 2
    %v634 = vadd.f32 %v632, %v633
    %v635 = vrot.slane %v634, 1
    %v636 = vadd.f32 %v634, %v635
    %v637 = vmul.f32 %v626, %v626
    %v638 = vrot.slane %v637, 4
    %v639 = vadd.f32 %v637, %v638
    %v640 = vrot.slane %v639, 2
    %v641 = vadd.f32 %v639, %v640
    %v642 = vrot.slane %v641, 1
    %v643 = vadd.f32 %v641, %v642
    %v644 = vmul.f32 %v636, 0.125
    %v645 = vmul.f32 %v643, 0.125
    %v646 = vmul.f32 %v644, %v644
    %v647 = vsub.f32 %v645, %v646
    %v648 = vadd.f32 %v647, 1e-05
    %v649 = vrsqrt.pop %v648
    %v650 = vmul.f32 %v629, %v649
    %v651 = vmul.f32 %v644, %v650
    %v652 = vsub.f32 %v630, %v651
    %v654 = vlaneseq
    %v655 = vshrl.u32 %v654, 7
    %v656 = vsub.s32 0, %v655
    %v657 = vrot.slane %v650, %v656
    %v659 = vmul.f32 %v626, %v657
    %v661 = vlaneseq
    %v662 = vshrl.u32 %v661, 7
    %v663 = vsub.s32 0, %v662
    %v664 = vrot.slane %v652, %v663
    %v666 = vadd.f32 %v659, %v664
    %v667 = vmax.f32 %v666, 0.0
    %v668 = vld [vmem:[#allocation13] sm:$0xff]
    %v669 = vld [vmem:[#allocation13 + $0x8] sm:$0xff]
    %v670 = vld [vmem:[#allocation13 + $0x10] sm:$0xff]
    %v671 = vld [vmem:[#allocation13 + $0x18] sm:$0xff]
    %v672 = vld [vmem:[#allocation13 + $0x20] sm:$0xff]
    %v673 = vld [vmem:[#allocation13 + $0x28] sm:$0xff]
    %v674 = vld [vmem:[#allocation13 + $0x30] sm:$0xff]
    %v675 = vld [vmem:[#allocation13 + $0x38] sm:$0xff]
    %v676 = vld [vmem:[#allocation13 + $0x40] sm:$0xff]
    %v677 = vld [vmem:[#allocation13 + $0x48] sm:$0xff]
    %v678 = vld [vmem:[#allocation13 + $0x50] sm:$0xff]
    %v679 = vld [vmem:[#allocation13 + $0x58] sm:$0xff]
    %v680 = vld [vmem:[#allocation13 + $0x60] sm:$0xff]
    %v681 = vld [vmem:[#allocation13 + $0x68] sm:$0xff]
    %v682 = vld [vmem:[#allocation13 + $0x70] sm:$0xff]
    %v683 = vld [vmem:[#allocation13 + $0x78] sm:$0xff]
    %684 = vmatprep.subr.mxu0 0.0
    %685 = vmatpush1.msra.mxu0 %v668
    %686 = vmatprep.subr.mxu0 0.0
    %687 = vmatpush1.msra.mxu0 %v669
    %688 = vmatprep.subr.mxu0 0.0
    %689 = vmatpush1.msra.mxu0 %v670
    %690 = vmatprep.subr.mxu0 0.0
    %691 = vmatpush1.msra.mxu0 %v671
    %692 = vmatprep.subr.mxu0 0.0
    %693 = vmatpush1.msra.mxu0 %v672
    %694 = vmatprep.subr.mxu0 0.0
    %695 = vmatpush1.msra.mxu0 %v673
    %696 = vmatprep.subr.mxu0 0.0
    %697 = vmatpush1.msra.mxu0 %v674
    %698 = vmatprep.subr.mxu0 0.0
    %699 = vmatpush1.msra.mxu0 %v675
    %700 = vmatprep.subr.mxu0 0.0
    %701 = vmatpush1.msra.mxu0 %v676
    %702 = vmatprep.subr.mxu0 0.0
    %703 = vmatpush1.msra.mxu0 %v677
    %704 = vmatprep.subr.mxu0 0.0
    %705 = vmatpush1.msra.mxu0 %v678
    %706 = vmatprep.subr.mxu0 0.0
    %707 = vmatpush1.msra.mxu0 %v679
    %708 = vmatprep.subr.mxu0 0.0
    %709 = vmatpush1.msra.mxu0 %v680
    %710 = vmatprep.subr.mxu0 0.0
    %711 = vmatpush1.msra.mxu0 %v681
    %712 = vmatprep.subr.mxu0 0.0
    %713 = vmatpush1.msra.mxu0 %v682
    %714 = vmatprep.subr.mxu0 0.0
    %715 = vmatpush1.msra.mxu0 %v683
    %716 = vmatprep.subr.mxu0 0.0
    %717 = vmatpush1.msra.mxu0 0.0
    %718 = vmatprep.subr.mxu0 0.0
    %719 = vmatpush1.msra.mxu0 0.0
    %720 = vmatprep.subr.mxu0 0.0
    %721 = vmatpush1.msra.mxu0 0.0
    %722 = vmatprep.subr.mxu0 0.0
    %723 = vmatpush1.msra.mxu0 0.0
    %724 = vmatprep.subr.mxu0 0.0
    %725 = vmatpush1.msra.mxu0 0.0
    %726 = vmatprep.subr.mxu0 0.0
    %727 = vmatpush1.msra.mxu0 0.0
    %728 = vmatprep.subr.mxu0 0.0
    %729 = vmatpush1.msra.mxu0 0.0
    %730 = vmatprep.subr.mxu0 0.0
    %731 = vmatpush1.msra.mxu0 0.0
    %732 = vmatprep.subr.mxu0 0.0
    %733 = vmatpush1.msra.mxu0 0.0
    %734 = vmatprep.subr.mxu0 0.0
    %735 = vmatpush1.msra.mxu0 0.0
    %736 = vmatprep.subr.mxu0 0.0
    %737 = vmatpush1.msra.mxu0 0.0
    %738 = vmatprep.subr.mxu0 0.0
    %739 = vmatpush1.msra.mxu0 0.0
    %740 = vmatprep.subr.mxu0 0.0
    %741 = vmatpush1.msra.mxu0 0.0
    %742 = vmatprep.subr.mxu0 0.0
    %743 = vmatpush1.msra.mxu0 0.0
    %744 = vmatprep.subr.mxu0 0.0
    %745 = vmatpush1.msra.mxu0 0.0
    %746 = vmatprep.subr.mxu0 0.0
    %747 = vmatpush1.msra.mxu0 0.0
    %748 = vmatprep.mubr.f32.mxu0 0.0
    %749 = vmatmul.mubr.f32.gmra.mrb[0].mxu0 %v667
    %v750 = vpop.f32.mrb[0].mxu0
    %v751 = vadd.f32 %v301, %v750
    %v752 = vpop.f32.mrb[0].mxu0
    %753 = vdwg.mxu0
    %v754 = vld [vmem:[%s7] sm:$0x1]
    %v756 = vlaneseq
    %v757 = vshrl.u32 %v756, 7
    %v758 = vsub.s32 0, %v757
    %v759 = vrot.slane %v754, %v758
    %v761 = vadd.f32 %v751, %v759
    %762 = vst [vmem:[#allocation14] sm:$0xff] %v761
    // Predicated region
    $region86: #{tpu_custom_call.1} parent=1 // pred_check
      _
    $region87: #{tpu_custom_call.1} parent=1 // pred_check_branch
      %764 = sbr.rel (0) target = $region89
    $region88: #{tpu_custom_call.1} parent=1 // pred_region
      %s766 = ssub.s32 128, 128
      %767 = vsyncadd [#allocation4], %s766
      %s769 = sshll.u32 [#allocation14], 4
      %s770 = int_to_ptr.vmem [resolvable:$true] %s769
      %772 = dma.vmem_to_hbm [thread:$0]  %s770, 128, %s14, [#allocation4]
    $region89: #{tpu_custom_call.1} parent=1 // pred_fallthru
      _
    // Predicated region
    $region90: #{tpu_custom_call.1} parent=1 // pred_check
      _
    $region91: #{tpu_custom_call.1} parent=1 // pred_check_branch
      %774 = sbr.rel (0) target = $region93
    $region92: #{tpu_custom_call.1} parent=1 // pred_region
      %775 = dma.done [#allocation4], 128
    $region93: #{tpu_custom_call.1} parent=1 // pred_fallthru
      _
    %776 = vsyncpa [#allocation3], 1
    %777 = vsyncpa [#allocation6], 1
    %778 = vsyncpa [#allocation9], 1
    %779 = vsyncpa [#allocation12], 1
    %780 = vsyncpa [#allocation4], 1

</llo_original>
